<compile_context>
chip_gen: v7x
topology: tpu7x:2x2x1
jax: 0.10.0
libtpu: 0.0.40
codegen_flags: <defaults>
</compile_context>

<pallas_src>
import functools
import math

import jax
import jax.numpy as jnp
from jax import lax
from jax.experimental import pallas as pl
from jax.experimental.pallas import tpu as pltpu


def _dwconv1d_kernel(*refs, K, hw, t_blk, r_sub, w_strip, has_halo):
    # refs (has_halo): x_ref (r_tile, t_blk), h_ref (1, r_tile, hw),
    #                  w_ref (rt, K), b_ref (rt, 1), o_ref (r_tile, t_blk)
    # refs (else)    : x_ref (r_tile, t_blk [+hw]), w_ref, b_ref, o_ref
    if has_halo:
        x_ref, h_ref, w_ref, b_ref, o_ref = refs
        hb = h_ref[0]                           # (r_tile, hw) -- tiny, stays resident
    else:
        x_ref, w_ref, b_ref, o_ref = refs
        hb = None

    t_in = x_ref.shape[1]
    r_tile = o_ref.shape[0]

    # Hoisted casts (once per block, not per tap / strip).
    wf = w_ref[...].astype(jnp.float32)         # (r_tile, K)
    bf = b_ref[...].astype(jnp.float32)         # (r_tile, 1)

    # Register-tiled compute: small output strips keep the live set well under
    # the 64-entry vreg file on every TPU generation (no spills in the K loop).
    for r0 in range(0, r_tile, r_sub):
        rs = min(r_sub, r_tile - r0)
        wfr = wf[r0:r0 + rs]                    # (rs, K)
        bfr = bf[r0:r0 + rs]                    # (rs, 1)
        for t0 in range(0, t_blk, w_strip):
            ws = min(w_strip, t_blk - t0)
            if t0 + ws + hw <= t_in:
                # Fully inside this block: aligned window load, no stitching.
                xin = x_ref[r0:r0 + rs, t0:t0 + ws + hw]
            else:
                # Boundary strip only: patch <= hw halo columns from h_ref.
                assert has_halo
                xin = jnp.concatenate(
                    [x_ref[r0:r0 + rs, t0:t_in], hb[r0:r0 + rs]], axis=-1)
            xin = xin.astype(jnp.float32)
            acc = jnp.zeros((rs, ws), jnp.float32)
            for k in range(K):                  # static unroll over taps
                acc = acc + xin[:, k:k + ws] * wfr[:, k:k + 1]
            o_ref[r0:r0 + rs, t0:t0 + ws] = (acc + bfr).astype(o_ref.dtype)


@functools.partial(
    jax.jit,
    static_argnames=("padding", "t_tile_max", "t_single_max", "r_tile_max", "w_strip"))
def depthwise_conv1d(x, weight, bias, *, padding,
                     t_tile_max=1024, t_single_max=2048, r_tile_max=64, w_strip=256):
    """x: (B, C, T); weight: (C, 1, K) (PyTorch depthwise layout); bias: (C,);
    padding: (pad_left, pad_right) applied to the time axis (F.pad semantics)."""
    B, C, T = x.shape
    Co, gin, K = weight.shape
    assert Co == C and gin == 1, "depthwise kernel assumes chan_out == chan_in"
    pad_l, pad_r = padding
    assert pad_l >= 0 and pad_r >= 0
    T_out = T + pad_l + pad_r - K + 1
    assert T_out > 0
    hw = K - 1

    # Fold batch into rows so the sublane axis is filled even for small C.
    R = B * C
    x2 = x.reshape(R, T)

    # ---- row tiling: multiples of 8 (sublanes); ragged last row block is legal
    if R < 8:
        r_tile = R
    else:
        r_tile = min(r_tile_max, (R // 8) * 8)

    # ---- time tiling: lane-dense blocks, as few grid steps as possible -------
    if T_out <= t_single_max:
        nb, t_blk = 1, T_out
    else:
        nb0 = pl.cdiv(T_out, t_tile_max)
        t_blk = ((pl.cdiv(T_out, nb0) + 127) // 128) * 128     # balanced, x128
        nb = pl.cdiv(T_out, t_blk)
    nr = pl.cdiv(R, r_tile)

    # Megacore / v7x: make sure there are at least two parallel grid steps.
    if nr * nb == 1 and R >= 16:
        r_tile = (((R + 1) // 2 + 7) // 8) * 8
        nr = pl.cdiv(R, r_tile)

    # ---- fused padding: one small pad; every main block read is in-bounds ----
    W_pad = nb * t_blk + hw
    x_p = jnp.pad(x2, ((0, 0), (pad_l, W_pad - pad_l - T)))

    has_halo = (nb > 1) and (hw > 0)
    t_in_blk = t_blk + hw if nb == 1 else t_blk

    # ---- per-row weights / bias (avoid B-fold duplication when r_tile | C) ---
    wc = weight.reshape(C, K)
    bc = bias.reshape(C, 1)
    if r_tile <= C and C % r_tile == 0 and (r_tile % 8 == 0 or r_tile == C):
        w_arr, b_arr = wc, bc
        n_cblk = C // r_tile
        wb_map = lambda r, j: (r % n_cblk, 0)
    else:
        w_arr = jnp.tile(wc, (B, 1))            # (R, K) -- tiny
        b_arr = jnp.tile(bc, (B, 1))            # (R, 1)
        wb_map = lambda r, j: (r, 0)

    in_specs = [pl.BlockSpec((r_tile, t_in_blk), lambda r, j: (r, j))]
    operands = [x_p]
    if has_halo:
        # Tiny (nb, R, K-1) halo side array: the first K-1 columns past each
        # time block, built with static slices (no gather / transpose chain).
        halo = jnp.stack(
            [lax.slice(x_p, (0, (j + 1) * t_blk), (R, (j + 1) * t_blk + hw))
             for j in range(nb)], axis=0)
        in_specs.append(pl.BlockSpec((1, r_tile, hw), lambda r, j: (j, r, 0)))
        operands.append(halo)
    in_specs += [pl.BlockSpec((r_tile, K), wb_map),
                 pl.BlockSpec((r_tile, 1), wb_map)]
    operands += [w_arr, b_arr]

    r_sub = 8 if r_tile % 8 == 0 else r_tile
    kernel = functools.partial(
        _dwconv1d_kernel, K=K, hw=hw, t_blk=t_blk, r_sub=r_sub,
        w_strip=w_strip, has_halo=has_halo)

    out2 = pl.pallas_call(
        kernel,
        out_shape=jax.ShapeDtypeStruct((R, T_out), x.dtype),
        grid_spec=pltpu.PrefetchScalarGridSpec(
            num_scalar_prefetch=0,
            grid=(nr, nb),
            in_specs=in_specs,
            out_specs=pl.BlockSpec((r_tile, t_blk), lambda r, j: (r, j)),
        ),
        compiler_params=pltpu.CompilerParams(
            dimension_semantics=("parallel", "parallel")),
    )(*operands)
    return out2.reshape(B, C, T_out)


def _reference(x, weight, bias, padding):
    # Pure-JAX reference: depthwise conv1d (groups = C) on the padded input.
    pad_l, pad_r = padding
    x_pad = jnp.pad(x, ((0, 0), (0, 0), (pad_l, pad_r)))
    C = x.shape[1]
    out = lax.conv_general_dilated(
        x_pad, weight, window_strides=(1,), padding="VALID",
        dimension_numbers=("NCH", "OIH", "NCH"), feature_group_count=C)
    return out + bias.reshape(1, C, 1)


if __name__ == "__main__":
    key = jax.random.PRNGKey(0)

    def run_case(B, C, T, K, padding, case_key):
        k1, k2, k3 = jax.random.split(case_key, 3)
        bound = 1.0 / math.sqrt(K)
        x = jax.random.normal(k1, (B, C, T), dtype=jnp.float32)
        w = jax.random.uniform(k2, (C, 1, K), jnp.float32, -bound, bound)
        b = jax.random.uniform(k3, (C,), jnp.float32, -bound, bound)
        out = jax.block_until_ready(depthwise_conv1d(x, w, b, padding=padding))
        ref = _reference(x, w, b, padding)
        assert out.shape == ref.shape, (out.shape, ref.shape)
        assert jnp.allclose(out, ref, atol=1e-4, rtol=1e-4), \
            float(jnp.max(jnp.abs(out - ref)))

    k1, k2, k3, key = jax.random.split(key, 4)
    # 1) Small shapes from the module spec (single time block, batch folded into rows).
    run_case(2, 4, 16, 3, (1, 1), k1)
    # 2) FCPE-like config (K=31 "same" conv): single time block, row-split grid,
    #    ragged output strips.
    run_case(1, 64, 1400, 31, (15, 15), k2)
    # 3) Long-T config: multi time-block path with the halo side array.
    run_case(1, 16, 2300, 5, (2, 2), k3)

    print("KERNEL_OK")
</pallas_src>

<mosaic_0001>
module attributes {stable_mosaic.version = 11 : i64} {
  func.func @_dwconv1d_kernel(%arg0: i32, %arg1: i32, %arg2: memref<8x18xf32, #tpu.memory_space<vmem>>, %arg3: memref<8x3xf32, #tpu.memory_space<vmem>>, %arg4: memref<8x1xf32, #tpu.memory_space<vmem>>, %arg5: memref<8x16xf32, #tpu.memory_space<vmem>>) attributes {dimension_semantics = [#tpu.dimension_semantics<parallel>, #tpu.dimension_semantics<parallel>], iteration_bounds = array<i64: 1, 1>, scalar_prefetch = 0 : i64, scratch_operands = 0 : i64, tpu.core_type = #tpu.core_type<tc>, window_params = [{transform_indices = @transform_0, window_bounds = array<i64: 8, 18>}, {transform_indices = @transform_1, window_bounds = array<i64: 8, 3>}, {transform_indices = @transform_2, window_bounds = array<i64: 8, 1>}, {transform_indices = @transform_3, window_bounds = array<i64: 8, 16>}]} {
    %c0 = arith.constant 0 : index
    %c0_0 = arith.constant 0 : index
    %0 = vector.load %arg3[%c0, %c0_0] : memref<8x3xf32, #tpu.memory_space<vmem>>, vector<8x3xf32>
    %c0_1 = arith.constant 0 : index
    %c0_2 = arith.constant 0 : index
    %1 = vector.load %arg4[%c0_1, %c0_2] : memref<8x1xf32, #tpu.memory_space<vmem>>, vector<8x1xf32>
    %c0_3 = arith.constant 0 : index
    %c0_4 = arith.constant 0 : index
    %2 = vector.load %arg2[%c0_3, %c0_4] : memref<8x18xf32, #tpu.memory_space<vmem>>, vector<8x18xf32>
    %cst = arith.constant 0.000000e+00 : f32
    %3 = vector.broadcast %cst : f32 to vector<8x16xf32>
    %4 = vector.extract_strided_slice %2 {offsets = [0, 0], sizes = [8, 16], strides = [1, 1]} : vector<8x18xf32> to vector<8x16xf32>
    %5 = vector.extract_strided_slice %0 {offsets = [0, 0], sizes = [8, 1], strides = [1, 1]} : vector<8x3xf32> to vector<8x1xf32>
    %6 = vector.broadcast %5 : vector<8x1xf32> to vector<8x16xf32>
    %7 = arith.mulf %4, %6 : vector<8x16xf32>
    %8 = arith.addf %3, %7 : vector<8x16xf32>
    %9 = vector.extract_strided_slice %2 {offsets = [0, 1], sizes = [8, 16], strides = [1, 1]} : vector<8x18xf32> to vector<8x16xf32>
    %10 = vector.extract_strided_slice %0 {offsets = [0, 1], sizes = [8, 1], strides = [1, 1]} : vector<8x3xf32> to vector<8x1xf32>
    %11 = vector.broadcast %10 : vector<8x1xf32> to vector<8x16xf32>
    %12 = arith.mulf %9, %11 : vector<8x16xf32>
    %13 = arith.addf %8, %12 : vector<8x16xf32>
    %14 = vector.extract_strided_slice %2 {offsets = [0, 2], sizes = [8, 16], strides = [1, 1]} : vector<8x18xf32> to vector<8x16xf32>
    %15 = vector.extract_strided_slice %0 {offsets = [0, 2], sizes = [8, 1], strides = [1, 1]} : vector<8x3xf32> to vector<8x1xf32>
    %16 = vector.broadcast %15 : vector<8x1xf32> to vector<8x16xf32>
    %17 = arith.mulf %14, %16 : vector<8x16xf32>
    %18 = arith.addf %13, %17 : vector<8x16xf32>
    %19 = vector.broadcast %1 : vector<8x1xf32> to vector<8x16xf32>
    %20 = arith.addf %18, %19 : vector<8x16xf32>
    %c0_5 = arith.constant 0 : index
    %c0_6 = arith.constant 0 : index
    %21 = vector.load %arg5[%c0_5, %c0_6] : memref<8x16xf32, #tpu.memory_space<vmem>>, vector<8x16xf32>
    tpu.vector_store %arg5[%c0_5, %c0_6], %20 {strides = array<i32>} : memref<8x16xf32, #tpu.memory_space<vmem>>, vector<8x16xf32>,
    return
  }
  func.func @transform_0(%arg0: i32, %arg1: i32) -> (i32, i32) {
    %c0_i32 = arith.constant 0 : i32
    return %arg0, %arg1 : i32, i32
  }
  func.func @transform_1(%arg0: i32, %arg1: i32) -> (i32, i32) {
    %c0_i32 = arith.constant 0 : i32
    %c0_i32_0 = arith.constant 0 : i32
    return %arg0, %c0_i32 : i32, i32
  }
  func.func @transform_2(%arg0: i32, %arg1: i32) -> (i32, i32) {
    %c0_i32 = arith.constant 0 : i32
    %c0_i32_0 = arith.constant 0 : i32
    return %arg0, %c0_i32 : i32, i32
  }
  func.func @transform_3(%arg0: i32, %arg1: i32) -> (i32, i32) {
    %c0_i32 = arith.constant 0 : i32
    return %arg0, %arg1 : i32, i32
  }
}

</mosaic_0001>

<llo_original>
// kernel: depthwise_conv1d.1
$region0: #{depthwise_conv1d.1}
  #allocation0 [shape = 'u32[]', space=smem, size = 0x4, offset = 0x4, fixed_abs, tag = 'smem constant byte address 0x4 - core index']
  #allocation1 [shape = 'u32[144,128]{1,0:T(1,128)}', space=vmem, size = 0x12000, scoped, tag = 'internal scratch']
  %s0 = inlined_call_operand.vmem [shape: f32[8,18], index: 0, kind: input, shape index: {}]
  %s1 = inlined_call_operand.vmem [shape: f32[8,3], index: 1, kind: input, shape index: {}]
  %s2 = inlined_call_operand.vmem [shape: f32[8,1], index: 2, kind: input, shape index: {}]
  %s3 = inlined_call_operand.hbm [shape: f32[8,16], index: 3, kind: output, shape index: {}]
  %s4 = sld [smem:[#allocation0]]
  $region22: #{depthwise_conv1d.1} parent=0
    _
  %s6 = ssub.s32 1, %s4
  %s7 = scalar_select 0, %s6, %s4
  $region1: #{depthwise_conv1d.1} parent=0
    #allocation2 [shape = 'u8[4096]{0}', space=vmem, size = 0x1000, scoped, tag = 'output window, operand 0, single buffered']
    #allocation3 [shape = 's32[1]{0}', space=sflag, size = 0x4, scoped, tag = 'scoped memory for depthwise_conv1d.1']
    %8 = vsyncpa [#allocation3], 0
    // Predicated region
    $region2: #{depthwise_conv1d.1} parent=1 // pred_check
      _
    $region3: #{depthwise_conv1d.1} parent=1 // pred_check_branch
      %10 = sbr.rel (0) target = $region5
    $region4: #{depthwise_conv1d.1} parent=1 // pred_region
      _
    $region5: #{depthwise_conv1d.1} parent=1 // pred_fallthru
      _
    // Predicated region
    $region6: #{depthwise_conv1d.1} parent=1 // pred_check
      _
    $region7: #{depthwise_conv1d.1} parent=1 // pred_check_branch
      %12 = sbr.rel (0) target = $region9
    $region8: #{depthwise_conv1d.1} parent=1 // pred_region
      _
    $region9: #{depthwise_conv1d.1} parent=1 // pred_fallthru
      _
    // Predicated region
    $region10: #{depthwise_conv1d.1} parent=1 // pred_check
      _
    $region11: #{depthwise_conv1d.1} parent=1 // pred_check_branch
      %14 = sbr.rel (0) target = $region13
    $region12: #{depthwise_conv1d.1} parent=1 // pred_region
      _
    $region13: #{depthwise_conv1d.1} parent=1 // pred_fallthru
      _
    %v15 = vld [vmem:[%s1] sm:$0xff]
    %v16 = vld [vmem:[%s2] sm:$0xff]
    %v17 = vld [vmem:[%s0] sm:$0xff]
    %19 = vset.pattern.permute.xlu0 0
    %20 = vperm.xlu0 %19, %v15
    %v21 = vpop.permute.xlu0 %20
    %v23 = vmul.f32 %v17, %v21
    %v24 = vadd.f32 %v23, 0.0
    %25 = vset.pattern.permute.xlu0 1
    %26 = vperm.xlu0 %25, %v15
    %v27 = vpop.permute.xlu0 %26
    %v29 = vmul.f32 %v17, %v27
    %31 = vrot.lane.b32.xlu0 %v29, 127
    %v32 = vpop.permute.xlu0 %31
    %v34 = vadd.f32 %v24, %v32
    %35 = vset.pattern.permute.xlu0 2
    %36 = vperm.xlu0 %35, %v15
    %v37 = vpop.permute.xlu0 %36
    %v39 = vmul.f32 %v17, %v37
    %41 = vrot.lane.b32.xlu0 %v39, 126
    %v42 = vpop.permute.xlu0 %41
    %v44 = vadd.f32 %v34, %v42
    %46 = vset.pattern.permute.xlu0 0
    %47 = vperm.xlu0 %46, %v16
    %v48 = vpop.permute.xlu0 %47
    %v50 = vadd.f32 %v44, %v48
    %vm51 = vcmask 130048
    %52 = vst.msk [vmem:[#allocation2] sm:$0xff] %vm51, %v50
    // Predicated region
    $region14: #{depthwise_conv1d.1} parent=1 // pred_check
      _
    $region15: #{depthwise_conv1d.1} parent=1 // pred_check_branch
      %54 = sbr.rel (0) target = $region17
    $region16: #{depthwise_conv1d.1} parent=1 // pred_region
      %s56 = ssub.s32 128, 128
      %57 = vsyncadd [#allocation3], %s56
      %s59 = sshll.u32 [#allocation2], 4
      %s60 = int_to_ptr.vmem [resolvable:$true] %s59
      %62 = dma.vmem_to_hbm [thread:$0]  %s60, 128, %s3, [#allocation3]
    $region17: #{depthwise_conv1d.1} parent=1 // pred_fallthru
      _
    // Predicated region
    $region18: #{depthwise_conv1d.1} parent=1 // pred_check
      _
    $region19: #{depthwise_conv1d.1} parent=1 // pred_check_branch
      %64 = sbr.rel (0) target = $region21
    $region20: #{depthwise_conv1d.1} parent=1 // pred_region
      %65 = dma.done [#allocation3], 128
    $region21: #{depthwise_conv1d.1} parent=1 // pred_fallthru
      _
    %66 = vsyncpa [#allocation3], 1

</llo_original>
